<compile_context>
chip_gen: v6e
topology: v6e:2x2x1
jax: 0.10.0
libtpu: 0.0.40
codegen_flags: <defaults>
</compile_context>

<pallas_src>
import functools

import jax
import jax.numpy as jnp
from jax.experimental import pallas as pl
from jax.experimental.pallas import tpu as pltpu

LN_EPS = 1e-5  # nn.LayerNorm default


def _round_up(a, b):
    return (a + b - 1) // b * b


def _vmem_capacity_bytes():
    # Trace-time hardware query; conservative (v7x-sized) fallback if unavailable.
    try:
        return int(pltpu.get_tpu_info().vmem_capacity_bytes)
    except Exception:
        return 64 * 1024 * 1024


def prenorm_kernel(x_ref, gamma_ref, beta_ref, w_ref, b_ref, o_ref, y_ref, *, true_d):
    # Grid: (row tiles i, output-column slabs j).  LayerNorm is computed once per row
    # tile (j == 0) into a VMEM scratch in the MXU operand dtype and reused for every
    # column slab of W.
    j = pl.program_id(1)

    @pl.when(j == 0)
    def _():
        x = x_ref[...].astype(jnp.float32)
        # Single-pass statistics in f32; padded feature lanes are zero so sums are
        # exact, divide by the true dim.  Clamp var to avoid cancellation -> negative.
        inv_d = jnp.float32(1.0 / true_d)
        s1 = jnp.sum(x, axis=-1, keepdims=True)
        s2 = jnp.sum(x * x, axis=-1, keepdims=True)
        mean = s1 * inv_d
        var = jnp.maximum(s2 * inv_d - mean * mean, 0.0)
        inv = jax.lax.rsqrt(var + LN_EPS)
        y = (x - mean) * inv
        y = y * gamma_ref[...].astype(jnp.float32) + beta_ref[...].astype(jnp.float32)
        y_ref[...] = y.astype(y_ref.dtype)

    # TODO(synk): for D <= ~2048 the j==0 LayerNorm serializes in front of the first
    # column-slab matmul of each row tile; pipelining LN of row tile i+1 behind the
    # last slabs of tile i (manual DMA + 2-deep y scratch) would hide that bubble.
    out = jnp.dot(y_ref[...], w_ref[...], preferred_element_type=jnp.float32)
    out = out + b_ref[...]
    o_ref[...] = out.astype(o_ref.dtype)


@functools.partial(jax.jit, static_argnames=("tm", "tn", "mxu_dtype"))
def prenorm(x, gamma, beta, w, b, *, tm=None, tn=512, mxu_dtype=jnp.bfloat16):
    """fn(LayerNorm(x)) with fn = Linear(D, D).  x: (..., D)."""
    orig_shape = x.shape
    D = orig_shape[-1]
    x2 = x.reshape(-1, D)
    N = x2.shape[0]

    x_item = jnp.dtype(x.dtype).itemsize
    cmp_item = jnp.dtype(mxu_dtype).itemsize
    out_item = x_item

    vmem_cap = _vmem_capacity_bytes()
    vmem_budget = min(int(vmem_cap * 0.85), vmem_cap - 8 * 1024 * 1024)

    # Generation-aware default row tile (W is re-streamed once per row tile, so tm sets
    # the W arithmetic intensity): 64 MiB parts (v7x) -> 512, 128 MiB parts -> 1024.
    if tm is None:
        tm = 512 if vmem_cap <= 64 * 1024 * 1024 else 1024

    # ---- Feature (K) axis padded to a lane-dense multiple of 128. ----
    D_pad = _round_up(max(D, 128), 128)

    # ---- Output-column slab: fixed lane-dense size; pad W's output columns up to a
    # multiple of it (instead of shrinking tn to a divisor of D, which collapses to 128
    # for awkward D and causes many tiny matmuls/DMAs). ----
    tn_eff = min(_round_up(tn, 128), D_pad)
    D_out = _round_up(max(D, 128), tn_eff)

    # ---- Row tile: multiple of the sublane quantum, >=2 tiles for megacore, VMEM-fit. ----
    sub = max(8, 32 // x_item)                     # 8 f32 / 16 bf16 / 32 int8
    tm_eff = min(_round_up(tm, sub), _round_up(N, sub))
    if _round_up(N, tm_eff) // tm_eff < 2 and N > sub:
        # Guarantee at least two row tiles so the 'parallel' axis occupies both v7x cores.
        tm_eff = _round_up(pl.cdiv(N, 2), sub)

    def _vmem_est(tm_e):
        return (2 * tm_e * D_pad * x_item          # x row tiles (double-buffered)
                + 2 * D_pad * tn_eff * cmp_item    # W column slabs
                + 2 * tm_e * tn_eff * out_item     # output tiles
                + tm_e * D_pad * cmp_item          # normalized-y scratch
                + 8 * D_pad * 4 + 4 * D_out * 4)   # gamma/beta/bias

    while _vmem_est(tm_eff) > vmem_budget and tm_eff > sub:
        tm_eff = max(sub, _round_up(tm_eff // 2, sub))
    # TODO(synk): for very large D (>=16K on v7x) even tm_eff==sub may not fit; a third
    # 'arbitrary' K grid axis with an f32 accumulator scratch would be needed there.

    N_pad = _round_up(N, tm_eff)

    # ---- Padding.  gamma/beta/bias padded with zeros -> padded lanes produce exact
    # zeros; W padded with zero rows/cols -> padded K lanes / output cols contribute
    # nothing to real outputs.  Padded zero rows of x produce finite junk, sliced off. ----
    gamma2 = gamma.reshape(1, D)
    beta2 = beta.reshape(1, D)
    b2 = b.reshape(1, D).astype(jnp.float32)
    w2 = w
    if D_pad != D:
        padk = D_pad - D
        x2 = jnp.pad(x2, ((0, 0), (0, padk)))
        gamma2 = jnp.pad(gamma2, ((0, 0), (0, padk)))
        beta2 = jnp.pad(beta2, ((0, 0), (0, padk)))
        w2 = jnp.pad(w2, ((0, padk), (0, 0)))
    if D_out != D:
        padn = D_out - D
        w2 = jnp.pad(w2, ((0, 0), (0, padn)))
        b2 = jnp.pad(b2, ((0, 0), (0, padn)))
    if N_pad != N:
        x2 = jnp.pad(x2, ((0, N_pad - N), (0, 0)))

    # MXU operand dtype (bf16 by default -> fast MXU passes + half the W DMA bytes).
    w2 = w2.astype(mxu_dtype)

    # Always set the scoped-VMEM limit (v5e default is only 16 MiB), with headroom.
    vmem_limit = int(min(max(_vmem_est(tm_eff) * 1.3, 32 * 1024 * 1024), vmem_budget))
    vmem_limit = max(vmem_limit, _vmem_est(tm_eff))

    n_row_tiles = N_pad // tm_eff
    cost = pl.CostEstimate(
        flops=2 * N_pad * D_pad * D_out,
        transcendentals=N_pad,
        bytes_accessed=(N_pad * D_pad * x_item                   # x read
                        + N_pad * D_out * out_item               # out write
                        + n_row_tiles * D_pad * D_out * cmp_item  # W re-streamed per row tile
                        + (2 * D_pad + D_out) * 4),
    )

    kernel = functools.partial(prenorm_kernel, true_d=float(D))

    out2 = pl.pallas_call(
        kernel,
        out_shape=jax.ShapeDtypeStruct((N_pad, D_out), x.dtype),
        grid_spec=pltpu.PrefetchScalarGridSpec(
            num_scalar_prefetch=0,
            grid=(n_row_tiles, D_out // tn_eff),
            in_specs=[
                pl.BlockSpec((tm_eff, D_pad), lambda i, j: (i, 0)),   # x row tile (resident over j)
                pl.BlockSpec((1, D_pad), lambda i, j: (0, 0)),        # gamma (resident)
                pl.BlockSpec((1, D_pad), lambda i, j: (0, 0)),        # beta
                pl.BlockSpec((D_pad, tn_eff), lambda i, j: (0, j)),   # W column slab
                pl.BlockSpec((1, tn_eff), lambda i, j: (0, j)),       # bias column slab
            ],
            out_specs=pl.BlockSpec((tm_eff, tn_eff), lambda i, j: (i, j)),
            scratch_shapes=[pltpu.VMEM((tm_eff, D_pad), mxu_dtype)],  # normalized rows
        ),
        compiler_params=pltpu.CompilerParams(
            dimension_semantics=("parallel", "arbitrary"),
            vmem_limit_bytes=vmem_limit),
        cost_estimate=cost,
    )(x2, gamma2, beta2, w2, b2)

    return out2[:N, :D].reshape(orig_shape)


def reference(x, gamma, beta, w, b):
    xf = x.astype(jnp.float32)
    mean = jnp.mean(xf, axis=-1, keepdims=True)
    var = jnp.mean((xf - mean) ** 2, axis=-1, keepdims=True)
    xn = (xf - mean) * jax.lax.rsqrt(var + LN_EPS)
    y = xn * gamma.astype(jnp.float32) + beta.astype(jnp.float32)
    return (y @ w.astype(jnp.float32) + b.astype(jnp.float32)).astype(x.dtype)


def reference_mixed(x, gamma, beta, w, b, mxu_dtype):
    """Same LayerNorm (f32) but matmul operands rounded to mxu_dtype, f32 accumulation."""
    xf = x.astype(jnp.float32)
    mean = jnp.mean(xf, axis=-1, keepdims=True)
    var = jnp.mean((xf - mean) ** 2, axis=-1, keepdims=True)
    y = (xf - mean) * jax.lax.rsqrt(var + LN_EPS)
    y = (y * gamma.astype(jnp.float32) + beta.astype(jnp.float32))
    y = y.astype(mxu_dtype).astype(jnp.float32)
    wq = w.astype(mxu_dtype).astype(jnp.float32)
    return (y @ wq + b.astype(jnp.float32)).astype(x.dtype)


if __name__ == "__main__":
    # Small shapes consistent with the module: x is (batch, seq, dim), LayerNorm over dim.
    B, S, D = 2, 8, 128
    key = jax.random.PRNGKey(0)
    kx, kg, kb, kw, kbb = jax.random.split(key, 5)

    x = jax.random.normal(kx, (B, S, D), dtype=jnp.float32)
    gamma = jnp.ones((D,), jnp.float32) + 0.01 * jax.random.normal(kg, (D,), jnp.float32)
    beta = 0.01 * jax.random.normal(kb, (D,), jnp.float32)
    w = jax.random.normal(kw, (D, D), jnp.float32) / jnp.sqrt(D)
    b = 0.01 * jax.random.normal(kbb, (D,), jnp.float32)

    # Default path: bf16 MXU operands, f32 LayerNorm + accumulation.
    out = jax.block_until_ready(prenorm(x, gamma, beta, w, b))
    assert out.shape == (B, S, D)
    ref_mx = reference_mixed(x, gamma, beta, w, b, jnp.bfloat16)
    ref_32 = reference(x, gamma, beta, w, b)
    err_mx = float(jnp.max(jnp.abs(out - ref_mx)))
    err_32 = float(jnp.max(jnp.abs(out - ref_32)))
    assert err_mx < 2e-3, ("mixed-precision mismatch", err_mx)
    assert err_32 < 6e-2, ("f32-reference mismatch", err_32)

    # Exact-f32 path + padding paths (D not a multiple of 128, row count not a tile multiple).
    B2, S2, D2 = 3, 5, 80
    kx2, kg2, kb2, kw2, kbb2 = jax.random.split(jax.random.PRNGKey(1), 5)
    x2 = jax.random.normal(kx2, (B2, S2, D2), dtype=jnp.float32)
    gamma2 = jnp.ones((D2,), jnp.float32) + 0.01 * jax.random.normal(kg2, (D2,), jnp.float32)
    beta2 = 0.01 * jax.random.normal(kb2, (D2,), jnp.float32)
    w2 = jax.random.normal(kw2, (D2, D2), jnp.float32) / jnp.sqrt(D2)
    b2 = 0.01 * jax.random.normal(kbb2, (D2,), jnp.float32)

    out2 = jax.block_until_ready(
        prenorm(x2, gamma2, beta2, w2, b2, mxu_dtype=jnp.float32))
    ref2 = reference(x2, gamma2, beta2, w2, b2)
    assert out2.shape == (B2, S2, D2)
    err2 = float(jnp.max(jnp.abs(out2 - ref2)))
    assert jnp.allclose(out2, ref2, atol=2e-4, rtol=2e-4), err2

    # TODO(synk): the PyTorch module's `fn` is arbitrary; only the common Linear(dim, dim)
    # case is fused here.
    print("KERNEL_OK")
</pallas_src>

<mosaic_0001>
module attributes {stable_mosaic.version = 11 : i64} {
  func.func @prenorm_kernel(%arg0: i32, %arg1: i32, %arg2: memref<8x128xf32, #tpu.memory_space<vmem>>, %arg3: memref<1x128xf32, #tpu.memory_space<vmem>>, %arg4: memref<1x128xf32, #tpu.memory_space<vmem>>, %arg5: memref<128x128xbf16, #tpu.memory_space<vmem>>, %arg6: memref<1x128xf32, #tpu.memory_space<vmem>>, %arg7: memref<8x128xf32, #tpu.memory_space<vmem>>, %arg8: memref<8x128xbf16, #tpu.memory_space<vmem>>) attributes {dimension_semantics = [#tpu.dimension_semantics<parallel>, #tpu.dimension_semantics<arbitrary>], iteration_bounds = array<i64: 2, 1>, scalar_prefetch = 0 : i64, scratch_operands = 1 : i64, tpu.core_type = #tpu.core_type<tc>, window_params = [{transform_indices = @transform_0, window_bounds = array<i64: 8, 128>}, {pipeline_mode = #tpu.pipeline_mode<synchronous>, transform_indices = @transform_1, window_bounds = array<i64: 1, 128>}, {pipeline_mode = #tpu.pipeline_mode<synchronous>, transform_indices = @transform_2, window_bounds = array<i64: 1, 128>}, {transform_indices = @transform_3, window_bounds = array<i64: 128, 128>}, {transform_indices = @transform_4, window_bounds = array<i64: 1, 128>}, {transform_indices = @transform_5, window_bounds = array<i64: 8, 128>}]} {
    %c0_i32 = arith.constant 0 : i32
    %0 = arith.cmpi eq, %arg1, %c0_i32 : i32
    %1 = arith.extui %0 : i1 to i32
    %c0_i32_0 = arith.constant 0 : i32
    %2 = arith.cmpi ne, %1, %c0_i32_0 : i32
    scf.if %2 {
      %c0_8 = arith.constant 0 : index
      %c0_9 = arith.constant 0 : index
      %10 = vector.load %arg2[%c0_8, %c0_9] : memref<8x128xf32, #tpu.memory_space<vmem>>, vector<8x128xf32>
      %cst_10 = arith.constant dense<0.000000e+00> : vector<8xf32>
      %11 = vector.multi_reduction <add>, %10, %cst_10 [1] : vector<8x128xf32> to vector<8xf32>
      %12 = vector.shape_cast %11 : vector<8xf32> to vector<8x1xf32>
      %13 = arith.mulf %10, %10 : vector<8x128xf32>
      %cst_11 = arith.constant dense<0.000000e+00> : vector<8xf32>
      %14 = vector.multi_reduction <add>, %13, %cst_11 [1] : vector<8x128xf32> to vector<8xf32>
      %15 = vector.shape_cast %14 : vector<8xf32> to vector<8x1xf32>
      %cst_12 = arith.constant 7.812500e-03 : f32
      %16 = vector.broadcast %cst_12 : f32 to vector<8x1xf32>
      %17 = arith.mulf %12, %16 : vector<8x1xf32>
      %cst_13 = arith.constant 7.812500e-03 : f32
      %18 = vector.broadcast %cst_13 : f32 to vector<8x1xf32>
      %19 = arith.mulf %15, %18 : vector<8x1xf32>
      %20 = arith.mulf %17, %17 : vector<8x1xf32>
      %21 = arith.subf %19, %20 : vector<8x1xf32>
      %cst_14 = arith.constant 0.000000e+00 : f32
      %22 = vector.broadcast %cst_14 : f32 to vector<8x1xf32>
      %23 = arith.maximumf %21, %22 : vector<8x1xf32>
      %cst_15 = arith.constant 9.99999974E-6 : f32
      %24 = vector.broadcast %cst_15 : f32 to vector<8x1xf32>
      %25 = arith.addf %23, %24 : vector<8x1xf32>
      %26 = math.rsqrt %25 : vector<8x1xf32>
      %27 = vector.broadcast %17 : vector<8x1xf32> to vector<8x128xf32>
      %28 = arith.subf %10, %27 : vector<8x128xf32>
      %29 = vector.broadcast %26 : vector<8x1xf32> to vector<8x128xf32>
      %30 = arith.mulf %28, %29 : vector<8x128xf32>
      %c0_16 = arith.constant 0 : index
      %c0_17 = arith.constant 0 : index
      %31 = vector.load %arg3[%c0_16, %c0_17] : memref<1x128xf32, #tpu.memory_space<vmem>>, vector<1x128xf32>
      %32 = vector.broadcast %31 : vector<1x128xf32> to vector<8x128xf32>
      %33 = arith.mulf %30, %32 : vector<8x128xf32>
      %c0_18 = arith.constant 0 : index
      %c0_19 = arith.constant 0 : index
      %34 = vector.load %arg4[%c0_18, %c0_19] : memref<1x128xf32, #tpu.memory_space<vmem>>, vector<1x128xf32>
      %35 = vector.broadcast %34 : vector<1x128xf32> to vector<8x128xf32>
      %36 = arith.addf %33, %35 : vector<8x128xf32>
      %37 = arith.truncf %36 : vector<8x128xf32> to vector<8x128xbf16>
      %c0_20 = arith.constant 0 : index
      %c0_21 = arith.constant 0 : index
      %38 = vector.load %arg8[%c0_20, %c0_21] : memref<8x128xbf16, #tpu.memory_space<vmem>>, vector<8x128xbf16>
      tpu.vector_store %arg8[%c0_20, %c0_21], %37 {strides = array<i32>} : memref<8x128xbf16, #tpu.memory_space<vmem>>, vector<8x128xbf16>,
    } else {
    }
    %c0 = arith.constant 0 : index
    %c0_1 = arith.constant 0 : index
    %3 = vector.load %arg8[%c0, %c0_1] : memref<8x128xbf16, #tpu.memory_space<vmem>>, vector<8x128xbf16>
    %c0_2 = arith.constant 0 : index
    %c0_3 = arith.constant 0 : index
    %4 = vector.load %arg5[%c0_2, %c0_3] : memref<128x128xbf16, #tpu.memory_space<vmem>>, vector<128x128xbf16>
    %cst = arith.constant dense<0.000000e+00> : vector<8x128xf32>
    %5 = tpu.matmul %3, %4, %cst {dimension_numbers = #tpu.dot_dimension_numbers<[1], [0], [0], [1], [0, 0, 1, 1], [], []>} : vector<8x128xbf16>, vector<128x128xbf16>, vector<8x128xf32> -> vector<8x128xf32>
    %c0_4 = arith.constant 0 : index
    %c0_5 = arith.constant 0 : index
    %6 = vector.load %arg6[%c0_4, %c0_5] : memref<1x128xf32, #tpu.memory_space<vmem>>, vector<1x128xf32>
    %7 = vector.broadcast %6 : vector<1x128xf32> to vector<8x128xf32>
    %8 = arith.addf %5, %7 : vector<8x128xf32>
    %c0_6 = arith.constant 0 : index
    %c0_7 = arith.constant 0 : index
    %9 = vector.load %arg7[%c0_6, %c0_7] : memref<8x128xf32, #tpu.memory_space<vmem>>, vector<8x128xf32>
    tpu.vector_store %arg7[%c0_6, %c0_7], %8 {strides = array<i32>} : memref<8x128xf32, #tpu.memory_space<vmem>>, vector<8x128xf32>,
    return
  }
  func.func @transform_0(%arg0: i32, %arg1: i32) -> (i32, i32) {
    %c0_i32 = arith.constant 0 : i32
    %c0_i32_0 = arith.constant 0 : i32
    return %arg0, %c0_i32 : i32, i32
  }
  func.func @transform_1(%arg0: i32, %arg1: i32) -> (i32, i32) {
    %c0_i32 = arith.constant 0 : i32
    %c0_i32_0 = arith.constant 0 : i32
    %c0_i32_1 = arith.constant 0 : i32
    return %c0_i32, %c0_i32_0 : i32, i32
  }
  func.func @transform_2(%arg0: i32, %arg1: i32) -> (i32, i32) {
    %c0_i32 = arith.constant 0 : i32
    %c0_i32_0 = arith.constant 0 : i32
    %c0_i32_1 = arith.constant 0 : i32
    return %c0_i32, %c0_i32_0 : i32, i32
  }
  func.func @transform_3(%arg0: i32, %arg1: i32) -> (i32, i32) {
    %c0_i32 = arith.constant 0 : i32
    %c0_i32_0 = arith.constant 0 : i32
    return %c0_i32, %arg1 : i32, i32
  }
  func.func @transform_4(%arg0: i32, %arg1: i32) -> (i32, i32) {
    %c0_i32 = arith.constant 0 : i32
    %c0_i32_0 = arith.constant 0 : i32
    return %c0_i32, %arg1 : i32, i32
  }
  func.func @transform_5(%arg0: i32, %arg1: i32) -> (i32, i32) {
    %c0_i32 = arith.constant 0 : i32
    return %arg0, %arg1 : i32, i32
  }
}

</mosaic_0001>

<llo_original>
// kernel: prenorm.1
$region0: #{prenorm.1}
  #allocation0 [shape = 'u32[]', space=smem, size = 0x4, offset = 0x4, fixed_abs, tag = 'smem constant byte address 0x4 - core index']
  #allocation1 [shape = 'u32[144,128]{1,0:T(1,128)}', space=vmem, size = 0x12000, scoped, tag = 'internal scratch']
  #allocation2 [shape = 'bf16[8,128]{1,0:T(8,128)(2,1)}', space=vmem, size = 0x800, scoped, tag = 'scratch operand']
  %s0 = inlined_call_operand.vmem [shape: f32[16,128], index: 0, kind: input, shape index: {}]
  %s1 = inlined_call_operand.vmem [shape: f32[1,128], index: 1, kind: input, shape index: {}]
  %s2 = inlined_call_operand.vmem [shape: f32[1,128], index: 2, kind: input, shape index: {}]
  %s3 = inlined_call_operand.vmem [shape: bf16[128,128], index: 3, kind: input, shape index: {}]
  %s4 = inlined_call_operand.vmem [shape: f32[1,128], index: 4, kind: input, shape index: {}]
  %s5 = inlined_call_operand.hbm [shape: f32[16,128], index: 5, kind: output, shape index: {}]
  %s6 = sld [smem:[#allocation0]]
  $region57: #{prenorm.1} parent=0
    _
  %s8 = ssub.s32 1, %s6
  %s9 = scalar_select 0, %s8, %s6
  $region1: #{prenorm.1} parent=0
    #allocation3 [shape = 'u8[8192]{0}', space=vmem, size = 0x2000, scoped, tag = 'output window, operand 0']
    #allocation4 [shape = 's32[2]{0}', space=sflag, size = 0x8, scoped, tag = 'scoped memory for prenorm.1']
    %10 = vsyncpa [#allocation4], 0
    %s11 = scalar_lea.sflag [#allocation4], 1
    %12 = vsyncpa %s11, 0
    loop: start=0, step=1, limit=4
    $region2: #{prenorm.1} parent=1 // loop_pre_header
      _
    $region3: #{prenorm.1} parent=1 // loop_header
      %s14 = sphi 0, %s18
      %p15 = scmp.ge.s32.totalorder %s14, 4
      %s21 = sphi 0, %s33
      %s22 = sphi 0, %s29
      %s23 = sphi 0, %s21
      %s24 = sphi 0, %s22
      %s25 = sphi 0, %s23
      %s26 = sphi 0, %s24
      %s36 = sphi 0, %s38
      %s39 = sphi 0, %s36
      %s40 = sphi 0, %s39
      %s56 = sphi 0, %s40
      %s60 = sphi 0, %s60
      %s62 = sphi 0, %s60
      %s63 = sphi 0, %s62
      %s77 = sphi 0, %s63
      %s81 = sphi 0, %s81
      %s83 = sphi 0, %s81
      %s84 = sphi 0, %s83
      %s98 = sphi 0, %s84
      %s104 = sphi 0, %s106
      %s107 = sphi 0, %s104
      %s108 = sphi 0, %s107
      %s124 = sphi 0, %s108
      %s130 = sphi 0, %s132
      %s133 = sphi 0, %s130
      %s134 = sphi 0, %s133
      %s150 = sphi 0, %s134
      %s158 = sphi 0, %s160
      %s161 = sphi 0, %s158
      %s162 = sphi 0, %s161
      %s178 = sphi 0, %s162
    $region4: #{prenorm.1} parent=1 // loop_header_branch
      %17 = sbr.rel (%p15) target = $region8
    $region5: #{prenorm.1} parent=1 // loop_body
      %s19 = ssub.s32 %s14, 1
      %s20 = ssub.s32 %s14, 2
      %s27 = sadd.s32 1, %s22
      %p28 = scmp.ge.s32.totalorder %s27, 1
      %s29 = scalar_select %p28, 0, %s27
      %s30 = sadd.s32 1, %s21
      %s31 = scalar_select %p28, %s30, %s21
      %p32 = scmp.ge.s32.totalorder %s31, 2
      %s33 = scalar_select %p32, 0, %s31
      %s34 = ssub.s32 %s21, %s33
      %p35 = scmp.eq.s32.totalorder %s34, 0
      %s37 = sadd.s32 %s36, 1
      %s38 = scalar_select %p35, %s36, %s37
      %p41 = pneg %p35
      %p42 = scmp.eq.s32.totalorder %s14, 1
      %p43 = por %p41, %p42
      %p44 = scmp.ne.s32.totalorder %s36, %s39
      %p45 = scmp.eq.s32.totalorder %s14, 0
      %p46 = por %p44, %p45
      %p47 = scmp.ne.s32.totalorder %s36, %s39
      %p48 = scmp.eq.s32.totalorder %s19, 1
      %p49 = por %p47, %p48
      %p50 = scmp.ne.s32.totalorder %s39, %s40
      %p51 = scmp.eq.s32.totalorder %s19, 0
      %p52 = por %p50, %p51
      %p53 = scmp.ne.s32.totalorder %s39, %s40
      %p54 = scmp.eq.s32.totalorder %s20, 1
      %p55 = por %p53, %p54
      %p57 = scmp.ne.s32.totalorder %s40, %s56
      %p58 = scmp.eq.s32.totalorder %s20, 0
      %p59 = por %p57, %p58
      %s61 = sadd.s32 %s60, 1
      %p64 = scmp.eq.s32.totalorder %s14, 1
      %p65 = scmp.ne.s32.totalorder %s60, %s62
      %p66 = scmp.eq.s32.totalorder %s14, 0
      %p67 = por %p65, %p66
      %p68 = scmp.ne.s32.totalorder %s60, %s62
      %p69 = scmp.eq.s32.totalorder %s19, 1
      %p70 = por %p68, %p69
      %p71 = scmp.ne.s32.totalorder %s62, %s63
      %p72 = scmp.eq.s32.totalorder %s19, 0
      %p73 = por %p71, %p72
      %p74 = scmp.ne.s32.totalorder %s62, %s63
      %p75 = scmp.eq.s32.totalorder %s20, 1
      %p76 = por %p74, %p75
      %p78 = scmp.ne.s32.totalorder %s63, %s77
      %p79 = scmp.eq.s32.totalorder %s20, 0
      %p80 = por %p78, %p79
      %s82 = sadd.s32 %s81, 1
      %p85 = scmp.eq.s32.totalorder %s14, 1
      %p86 = scmp.ne.s32.totalorder %s81, %s83
      %p87 = scmp.eq.s32.totalorder %s14, 0
      %p88 = por %p86, %p87
      %p89 = scmp.ne.s32.totalorder %s81, %s83
      %p90 = scmp.eq.s32.totalorder %s19, 1
      %p91 = por %p89, %p90
      %p92 = scmp.ne.s32.totalorder %s83, %s84
      %p93 = scmp.eq.s32.totalorder %s19, 0
      %p94 = por %p92, %p93
      %p95 = scmp.ne.s32.totalorder %s83, %s84
      %p96 = scmp.eq.s32.totalorder %s20, 1
      %p97 = por %p95, %p96
      %p99 = scmp.ne.s32.totalorder %s84, %s98
      %p100 = scmp.eq.s32.totalorder %s20, 0
      %p101 = por %p99, %p100
      %s102 = ssub.s32 %s22, %s29
      %p103 = scmp.eq.s32.totalorder %s102, 0
      %s105 = sadd.s32 %s104, 1
      %s106 = scalar_select %p103, %s104, %s105
      %p109 = pneg %p103
      %p110 = scmp.eq.s32.totalorder %s14, 1
      %p111 = por %p109, %p110
      %p112 = scmp.ne.s32.totalorder %s104, %s107
      %p113 = scmp.eq.s32.totalorder %s14, 0
      %p114 = por %p112, %p113
      %p115 = scmp.ne.s32.totalorder %s104, %s107
      %p116 = scmp.eq.s32.totalorder %s19, 1
      %p117 = por %p115, %p116
      %p118 = scmp.ne.s32.totalorder %s107, %s108
      %p119 = scmp.eq.s32.totalorder %s19, 0
      %p120 = por %p118, %p119
      %p121 = scmp.ne.s32.totalorder %s107, %s108
      %p122 = scmp.eq.s32.totalorder %s20, 1
      %p123 = por %p121, %p122
      %p125 = scmp.ne.s32.totalorder %s108, %s124
      %p126 = scmp.eq.s32.totalorder %s20, 0
      %p127 = por %p125, %p126
      %s128 = ssub.s32 %s22, %s29
      %p129 = scmp.eq.s32.totalorder %s128, 0
      %s131 = sadd.s32 %s130, 1
      %s132 = scalar_select %p129, %s130, %s131
      %p135 = pneg %p129
      %p136 = scmp.eq.s32.totalorder %s14, 1
      %p137 = por %p135, %p136
      %p138 = scmp.ne.s32.totalorder %s130, %s133
      %p139 = scmp.eq.s32.totalorder %s14, 0
      %p140 = por %p138, %p139
      %p141 = scmp.ne.s32.totalorder %s130, %s133
      %p142 = scmp.eq.s32.totalorder %s19, 1
      %p143 = por %p141, %p142
      %p144 = scmp.ne.s32.totalorder %s133, %s134
      %p145 = scmp.eq.s32.totalorder %s19, 0
      %p146 = por %p144, %p145
      %p147 = scmp.ne.s32.totalorder %s133, %s134
      %p148 = scmp.eq.s32.totalorder %s20, 1
      %p149 = por %p147, %p148
      %p151 = scmp.ne.s32.totalorder %s134, %s150
      %p152 = scmp.eq.s32.totalorder %s20, 0
      %p153 = por %p151, %p152
      %s154 = ssub.s32 %s21, %s33
      %s155 = ssub.s32 %s22, %s29
      %s156 = sor.u32 %s154, %s155
      %p157 = scmp.eq.s32.totalorder %s156, 0
      %s159 = sadd.s32 %s158, 1
      %s160 = scalar_select %p157, %s158, %s159
      %p163 = pneg %p157
      %p164 = scmp.eq.s32.totalorder %s14, 1
      %p165 = por %p163, %p164
      %p166 = scmp.ne.s32.totalorder %s158, %s161
      %p167 = scmp.eq.s32.totalorder %s14, 0
      %p168 = por %p166, %p167
      %p169 = scmp.ne.s32.totalorder %s158, %s161
      %p170 = scmp.eq.s32.totalorder %s19, 1
      %p171 = por %p169, %p170
      %p172 = scmp.ne.s32.totalorder %s161, %s162
      %p173 = scmp.eq.s32.totalorder %s19, 0
      %p174 = por %p172, %p173
      %p175 = scmp.ne.s32.totalorder %s161, %s162
      %p176 = scmp.eq.s32.totalorder %s20, 1
      %p177 = por %p175, %p176
      %p179 = scmp.ne.s32.totalorder %s162, %s178
      %p180 = scmp.eq.s32.totalorder %s20, 0
      %p181 = por %p179, %p180
      %p182 = scmp.le.s32.totalorder 1, %s14
      %p183 = scmp.lt.s32.totalorder %s14, 3
      %p184 = pnand %p182, %p183
      %p185 = pneg %p184
      // Predicated region
      $region9: #{prenorm.1} parent=5 // pred_check
        _
      $region10: #{prenorm.1} parent=5 // pred_check_branch
        %187 = sbr.rel (%p184) target = $region12
      $region11: #{prenorm.1} parent=5 // pred_region
        %s188 = ssub.s32 %s14, 1
        // Predicated region
        $region13: #{prenorm.1} parent=11 // pred_check
          %p189 = pneg %p73
        $region14: #{prenorm.1} parent=11 // pred_check_branch
          %191 = sbr.rel (%p189) target = $region16
        $region15: #{prenorm.1} parent=11 // pred_region
          _
        $region16: #{prenorm.1} parent=11 // pred_fallthru
          _
        // Predicated region
        $region17: #{prenorm.1} parent=11 // pred_check
          %p192 = pneg %p94
        $region18: #{prenorm.1} parent=11 // pred_check_branch
          %194 = sbr.rel (%p192) target = $region20
        $region19: #{prenorm.1} parent=11 // pred_region
          _
        $region20: #{prenorm.1} parent=11 // pred_fallthru
          _
        // Predicated region
        $region21: #{prenorm.1} parent=11 // pred_check
          %p195 = pneg %p120
        $region22: #{prenorm.1} parent=11 // pred_check_branch
          %197 = sbr.rel (%p195) target = $region24
        $region23: #{prenorm.1} parent=11 // pred_region
          %p198 = scmp.lt.s32.totalorder %s24, 0
          %s199 = scalar_select %p198, %s24, 0
          %s200 = smul.addr %s199, 4
          %s201 = scalar_lea.vmem %s3, %s200
        $region24: #{prenorm.1} parent=11 // pred_fallthru
          _
        // Predicated region
        $region25: #{prenorm.1} parent=11 // pred_check
          %p202 = pneg %p146
        $region26: #{prenorm.1} parent=11 // pred_check_branch
          %204 = sbr.rel (%p202) target = $region28
        $region27: #{prenorm.1} parent=11 // pred_region
          %p205 = scmp.lt.s32.totalorder %s24, 0
          %s206 = scalar_select %p205, %s24, 0
          %s207 = scalar_lea.vmem %s4, %s206
        $region28: #{prenorm.1} parent=11 // pred_fallthru
          _
      $region12: #{prenorm.1} parent=5 // pred_fallthru
        _
      %p208 = scmp.lt.s32.totalorder %s14, 2
      // Predicated region
      $region29: #{prenorm.1} parent=5 // pred_check
        %p209 = pneg %p208
      $region30: #{prenorm.1} parent=5 // pred_check_branch
        %211 = sbr.rel (%p209) target = $region32
      $region31: #{prenorm.1} parent=5 // pred_region
        // Predicated region
        $region33: #{prenorm.1} parent=31 // pred_check
          %p212 = pneg %p46
        $region34: #{prenorm.1} parent=31 // pred_check_branch
          %214 = sbr.rel (%p212) target = $region36
        $region35: #{prenorm.1} parent=31 // pred_region
          %p215 = scmp.lt.s32.totalorder %s21, 1
          %s216 = scalar_select %p215, %s21, 1
          %s217 = smul.addr %s216, 8
          %s218 = scalar_lea.vmem %s0, %s217
        $region36: #{prenorm.1} parent=31 // pred_fallthru
          _
      $region32: #{prenorm.1} parent=5 // pred_fallthru
        _
      %p219 = scmp.le.s32.totalorder 1, %s14
      %p220 = scmp.lt.s32.totalorder %s14, 3
      %p221 = pnand %p219, %p220
      %p222 = pneg %p221
      // Predicated region
      $region37: #{prenorm.1} parent=5 // pred_check
        _
      $region38: #{prenorm.1} parent=5 // pred_check_branch
        %224 = sbr.rel (%p221) target = $region40
      $region39: #{prenorm.1} parent=5 // pred_region
        %s225 = ssub.s32 %s14, 1
        %p226 = scmp.lt.s32.totalorder %s23, 1
        %s227 = scalar_select %p226, %s23, 1
        %s228 = smul.addr %s227, 8
        %s229 = scalar_lea.vmem %s0, %s228
        %p230 = pneg %p52
        %p231 = pneg %p49
        %p232 = pneg %p73
        %p233 = pneg %p70
        %p234 = pneg %p94
        %p235 = pneg %p91
        %p236 = scmp.lt.s32.totalorder %s24, 0
        %s237 = scalar_select %p236, %s24, 0
        %s238 = smul.addr %s237, 4
        %s239 = scalar_lea.vmem %s3, %s238
        %p240 = pneg %p120
        %p241 = pneg %p117
        %p242 = scmp.lt.s32.totalorder %s24, 0
        %s243 = scalar_select %p242, %s24, 0
        %s244 = scalar_lea.vmem %s4, %s243
        %p245 = pneg %p146
        %p246 = pneg %p143
        %p247 = pneg %p174
        %p248 = pneg %p171
        %s249 = sand.u32 %s161, 1
        %s250 = scalar_lea.sflag [#allocation4], %s249
        %s251 = sand.u32 %s161, 1
        %s252 = smul.addr %s251, 8
        %s253 = scalar_lea.vmem [#allocation3], %s252
        %p254 = scmp.lt.s32.totalorder %s23, 1
        %s255 = scalar_select %p254, %s23, 1
        %s256 = smul.addr %s255, 8
        %s257 = scalar_lea.vmem %s0, %s256
        %p258 = scmp.lt.s32.totalorder %s24, 0
        %s259 = scalar_select %p258, %s24, 0
        %s260 = smul.addr %s259, 4
        %s261 = scalar_lea.vmem %s3, %s260
        %p262 = scmp.lt.s32.totalorder %s24, 0
        %s263 = scalar_select %p262, %s24, 0
        %s264 = scalar_lea.vmem %s4, %s263
        %p266 = scmp.eq.s32.totalorder %s24, 0
        // Predicated region
        $region41: #{prenorm.1} parent=39 // pred_check
          %p267 = pneg %p266
        $region42: #{prenorm.1} parent=39 // pred_check_branch
          %269 = sbr.rel (%p267) target = $region44
        $region43: #{prenorm.1} parent=39 // pred_region
          %v270 = vld [vmem:[%s257] sm:$0xff]
          %271 = vadd.xlane.f32.xlu0 %v270
          %v272 = vpop.xlane.xlu0 %271
          %v273 = vmul.f32 %v270, %v270
          %274 = vadd.xlane.f32.xlu0 %v273
          %v275 = vpop.xlane.xlu0 %274
          %v276 = vmul.f32 %v272, 0.0078125
          %v277 = vmul.f32 %v275, 0.0078125
          %v278 = vmul.f32 %v276, %v276
          %v279 = vsub.f32 %v277, %v278
          %v280 = vmax.f32 %v279, 0.0
          %v281 = vadd.f32 %v280, 1e-05
          %v282 = vrsqrt.pop %v281
          %v283 = vsub.f32 %v270, %v276
          %v284 = vmul.f32 %v283, %v282
          %v285 = vld [vmem:[%s1] sm:$0x1]
          %v287 = vlaneseq
          %v288 = vshrl.u32 %v287, 7
          %v289 = vsub.s32 0, %v288
          %v290 = vrot.slane %v285, %v289
          %v292 = vmul.f32 %v284, %v290
          %v293 = vld [vmem:[%s2] sm:$0x1]
          %v295 = vlaneseq
          %v296 = vshrl.u32 %v295, 7
          %v297 = vsub.s32 0, %v296
          %v298 = vrot.slane %v293, %v297
          %v300 = vadd.f32 %v292, %v298
          %v301 = vpack.c.bf16 %v300, %v300
          %302 = vst [vmem:[#allocation2] sm:$0xf] %v301
        $region44: #{prenorm.1} parent=39 // pred_fallthru
          _
        %v303 = vld [vmem:[#allocation2] sm:$0xf]
        %v304 = vld [vmem:[%s261] sm:$0xf]
        %v305 = vld [vmem:[%s261 + $0x4] sm:$0xf]
        %v306 = vld [vmem:[%s261 + $0x8] sm:$0xf]
        %v307 = vld [vmem:[%s261 + $0xc] sm:$0xf]
        %v308 = vld [vmem:[%s261 + $0x10] sm:$0xf]
        %v309 = vld [vmem:[%s261 + $0x14] sm:$0xf]
        %v310 = vld [vmem:[%s261 + $0x18] sm:$0xf]
        %v311 = vld [vmem:[%s261 + $0x1c] sm:$0xf]
        %v312 = vld [vmem:[%s261 + $0x20] sm:$0xf]
        %v313 = vld [vmem:[%s261 + $0x24] sm:$0xf]
        %v314 = vld [vmem:[%s261 + $0x28] sm:$0xf]
        %v315 = vld [vmem:[%s261 + $0x2c] sm:$0xf]
        %v316 = vld [vmem:[%s261 + $0x30] sm:$0xf]
        %v317 = vld [vmem:[%s261 + $0x34] sm:$0xf]
        %v318 = vld [vmem:[%s261 + $0x38] sm:$0xf]
        %v319 = vld [vmem:[%s261 + $0x3c] sm:$0xf]
        %v320 = vld [vmem:[%s264] sm:$0x1]
        %v322 = vlaneseq
        %v323 = vshrl.u32 %v322, 7
        %v324 = vsub.s32 0, %v323
        %v325 = vrot.slane %v320, %v324
        %v343 = vunpack.c.l.b16 %v304
        %v344 = vunpack.c.l.b16 %v305
        %v345 = vunpack.c.l.b16 %v306
        %v346 = vunpack.c.l.b16 %v307
        %v347 = vunpack.c.l.b16 %v308
        %v348 = vunpack.c.l.b16 %v309
        %v349 = vunpack.c.l.b16 %v310
        %v350 = vunpack.c.l.b16 %v311
        %v351 = vunpack.c.l.b16 %v312
        %v352 = vunpack.c.l.b16 %v313
        %v353 = vunpack.c.l.b16 %v314
        %v354 = vunpack.c.l.b16 %v315
        %v355 = vunpack.c.l.b16 %v316
        %v356 = vunpack.c.l.b16 %v317
        %v357 = vunpack.c.l.b16 %v318
        %v358 = vunpack.c.l.b16 %v319
        %v359 = vpack.c.b16 %v344, %v343
        %v360 = vpack.c.b16 %v346, %v345
        %v361 = vpack.c.b16 %v348, %v347
        %v362 = vpack.c.b16 %v350, %v349
        %v363 = vpack.c.b16 %v352, %v351
        %v364 = vpack.c.b16 %v354, %v353
        %v365 = vpack.c.b16 %v356, %v355
        %v366 = vpack.c.b16 %v358, %v357
        %375 = vmatprep.subr.bf16.mxu0 0
        %376 = vmatpush1.bf16.msra.mxu0 %v366
        %377 = vmatprep.subr.bf16.mxu0 0
        %378 = vmatpush1.bf16.msra.mxu0 %v365
        %379 = vmatprep.subr.bf16.mxu0 0
        %380 = vmatpush1.bf16.msra.mxu0 %v364
        %381 = vmatprep.subr.bf16.mxu0 0
        %382 = vmatpush1.bf16.msra.mxu0 %v363
        %383 = vmatprep.subr.bf16.mxu0 0
        %384 = vmatpush1.bf16.msra.mxu0 %v362
        %385 = vmatprep.subr.bf16.mxu0 0
        %386 = vmatpush1.bf16.msra.mxu0 %v361
        %387 = vmatprep.subr.bf16.mxu0 0
        %388 = vmatpush1.bf16.msra.mxu0 %v360
        %389 = vmatprep.subr.bf16.mxu0 0
        %390 = vmatpush1.bf16.msra.mxu0 %v359
        %391 = vmatprep.subr.bf16.mxu0 0
        %392 = vmatpush2.bf16.msra.mxu0 0
        %393 = vmatprep.subr.bf16.mxu0 0
        %394 = vmatpush2.bf16.msra.mxu0 0
        %395 = vmatprep.subr.bf16.mxu0 0
        %396 = vmatpush2.bf16.msra.mxu0 0
        %397 = vmatprep.subr.bf16.mxu0 0
        %398 = vmatpush2.bf16.msra.mxu0 0
        %399 = vmatprep.subr.bf16.mxu0 0
        %400 = vmatpush2.bf16.msra.mxu0 0
        %401 = vmatprep.subr.bf16.mxu0 0
        %402 = vmatpush2.bf16.msra.mxu0 0
        %403 = vmatprep.subr.bf16.mxu0 0
        %404 = vmatpush2.bf16.msra.mxu0 0
        %405 = vmatprep.subr.bf16.mxu0 0
        %406 = vmatpush2.bf16.msra.mxu0 0
        %407 = vmatprep.mubr.bf16.mxu0 0
        %408 = vmatmul.mubr.bf16.gmra.mxu0 %v303
        %v409 = vpop.f32.mrf.mxu0
        %v410 = vadd.f32 %v325, %v409
        %v411 = vpop.f32.mrf.mxu0
        %v412 = vpop.f32.mrf.mxu0
        %v413 = vpop.f32.mrf.mxu0
        %414 = vdwg.mxu0
        %415 = vst [vmem:[%s253] sm:$0xff] %v410
        %s416 = sand.u32 %s161, 1
        %s417 = scalar_lea.sflag [#allocation4], %s416
        %s418 = sand.u32 %s161, 1
        %s419 = smul.addr %s418, 8
        %s420 = scalar_lea.vmem [#allocation3], %s419
        // Predicated region
        $region45: #{prenorm.1} parent=39 // pred_check
          %p421 = pneg %p171
        $region46: #{prenorm.1} parent=39 // pred_check_branch
          %423 = sbr.rel (%p421) target = $region48
        $region47: #{prenorm.1} parent=39 // pred_region
          %s425 = ssub.s32 128, 128
          %426 = vsyncadd %s417, %s425
          %s427 = sadd.s32 %s24, %s23
          %s428 = smul.addr %s427, 128
          %s429 = scalar_lea.hbm %s5, %s428
          %s431 = sshll.u32 %s420, 4
          %s432 = int_to_ptr.vmem [resolvable:$true] %s431
          %434 = dma.vmem_to_hbm [thread:$0]  %s432, 128, %s429, %s417
        $region48: #{prenorm.1} parent=39 // pred_fallthru
          _
      $region40: #{prenorm.1} parent=5 // pred_fallthru
        _
      %p435 = scmp.le.s32.totalorder 2, %s14
      // Predicated region
      $region49: #{prenorm.1} parent=5 // pred_check
        %p436 = pneg %p435
      $region50: #{prenorm.1} parent=5 // pred_check_branch
        %438 = sbr.rel (%p436) target = $region52
      $region51: #{prenorm.1} parent=5 // pred_region
        %s439 = ssub.s32 %s14, 2
        // Predicated region
        $region53: #{prenorm.1} parent=51 // pred_check
          %p440 = pneg %p177
        $region54: #{prenorm.1} parent=51 // pred_check_branch
          %442 = sbr.rel (%p440) target = $region56
        $region55: #{prenorm.1} parent=51 // pred_region
          %s443 = sand.u32 %s162, 1
          %s444 = scalar_lea.sflag [#allocation4], %s443
          %s445 = sand.u32 %s162, 1
          %s446 = smul.addr %s445, 8
          %s447 = scalar_lea.vmem [#allocation3], %s446
          %448 = dma.done %s444, 128
        $region56: #{prenorm.1} parent=51 // pred_fallthru
          _
      $region52: #{prenorm.1} parent=5 // pred_fallthru
        _
    $region6: #{prenorm.1} parent=1 // loop_footer
      %s18 = sadd.s32 1, %s14
    $region7: #{prenorm.1} parent=1 // loop_footer_branch
      %13 = sbr.rel target = $region3
    $region8: #{prenorm.1} parent=1 // loop_exit
      _
    %449 = vsyncpa [#allocation4], 1
    %s450 = scalar_lea.sflag [#allocation4], 1
    %451 = vsyncpa %s450, 1

</llo_original>
